<compile_context>
chip_gen: v5e
topology: v5e:2x2
jax: 0.10.0
libtpu: 0.0.40
codegen_flags: <defaults>
</compile_context>

<pallas_src>
import jax
import jax.numpy as jnp
from jax.experimental import pallas as pl
from jax.experimental.pallas import tpu as pltpu

LANE = 128
SUBLANE = 8


def _round_up(n, m):
    return ((n + m - 1) // m) * m


def mlp_kernel(x_ref, w1_ref, b1_ref, w2_ref, b2_ref, o_ref):
    # ---- layer_input: (TILE_B, D_in_p) @ (D_in_p, H_p) + b1, f32 accumulation.
    x = x_ref[...]
    w1 = w1_ref[...]
    dot_dt = jnp.promote_types(x.dtype, w1.dtype)  # bf16 x + bf16 w -> native MXU
    h = jnp.dot(x.astype(dot_dt), w1.astype(dot_dt),
                preferred_element_type=jnp.float32)
    h = h + b1_ref[...]

    # Dropout: eval-mode semantics (identity) for deterministic inference.
    # TODO(synk): training-mode dropout (p=0.5) would use pltpu.prng_seed/prng_random_bits.

    # ReLU in f32 on the VPU (keep elementwise math f32 -> v5e friendly).
    h = jnp.maximum(h, 0.0)

    # ---- layer_hidden: (TILE_B, H_p) @ (H_p, O_p) + b2.
    w2 = w2_ref[...]
    logits = jnp.dot(h.astype(w2.dtype), w2, preferred_element_type=jnp.float32)
    logits = logits + b2_ref[...]   # padded classes carry bias -1e30 -> exp() == 0

    # Numerically stable softmax over the lane-dense (128-wide) class axis.
    m = jnp.max(logits, axis=-1, keepdims=True)
    e = jnp.exp(logits - m)
    denom = jnp.sum(e, axis=-1, keepdims=True)
    o_ref[...] = (e / denom).astype(o_ref.dtype)   # exact divide: denom is (TILE_B, 1)


def mlp_forward(x_nchw, w1, b1, w2, b2, *, tile_b=512,
                use_bf16_activations=False, use_bf16_weights=False):
    """x_nchw: (B, C, H, W) float32. Returns (B, dim_out) softmax probabilities."""
    B = x_nchw.shape[0]
    dim_in = x_nchw.shape[1] * x_nchw.shape[-2] * x_nchw.shape[-1]
    dim_hidden = w1.shape[1]
    dim_out = w2.shape[1]

    x_dtype = jnp.bfloat16 if use_bf16_activations else jnp.float32
    w_dtype = jnp.bfloat16 if use_bf16_weights else jnp.float32

    # Flatten == torch x.view(-1, C*H*W). Cast BEFORE pallas_call so the dominant
    # HBM byte stream (x) is halved when bf16 activations are requested.
    x2d = x_nchw.reshape(B, dim_in).astype(x_dtype)

    # ---- Lane-dense padding of feature dims ----------------------------------
    in_p = _round_up(dim_in, LANE)
    hid_p = _round_up(dim_hidden, LANE)
    out_p = _round_up(dim_out, LANE)

    # Only materialize a padded x when dim_in is not lane-aligned (keeps junk
    # columns away from w1; extra w1 rows are zero regardless).
    if in_p != dim_in:
        x2d = jnp.pad(x2d, ((0, 0), (0, in_p - dim_in)))

    w1p = jnp.zeros((in_p, hid_p), w_dtype).at[:dim_in, :dim_hidden].set(
        w1.astype(w_dtype))
    b1p = jnp.zeros((1, hid_p), jnp.float32).at[:, :dim_hidden].set(b1.reshape(1, -1))
    w2p = jnp.zeros((hid_p, out_p), w_dtype).at[:dim_hidden, :dim_out].set(
        w2.astype(w_dtype))
    # Padded output classes: hugely negative bias => exp() == 0 => no softmax leak.
    b2p = jnp.full((1, out_p), -1e30, jnp.float32).at[:, :dim_out].set(b2.reshape(1, -1))

    # ---- Batch tiling (sublane-aligned; no batch padding) ---------------------
    tb = _round_up(min(tile_b, B), SUBLANE)
    if B > tb:
        # v7x megacore: aim for an even number (>=2) of grid steps so both
        # TensorCores get work; harmless no-op on single-TC v5e/v6e.
        n_steps = pl.cdiv(B, tb)
        if n_steps % 2:
            n_steps += 1
        tb = _round_up(pl.cdiv(B, n_steps), SUBLANE)
    grid = (pl.cdiv(B, tb),)

    # ---- Explicit VMEM budget (double-buffered x/out tiles + resident weights) -
    xb = jnp.dtype(x_dtype).itemsize
    wb = jnp.dtype(w_dtype).itemsize
    est = (2 * tb * in_p * xb                          # x tiles (double-buffered)
           + 2 * (in_p * hid_p + hid_p * out_p) * wb   # weights (2 pipeline copies)
           + 2 * (hid_p + out_p) * 4                   # biases
           + 2 * tb * out_p * 4                        # output tiles (double-buffered)
           + 2 * tb * (hid_p + out_p) * 4)             # h / logits live values
    vmem_limit = int(min(max(2 * est, 32 << 20), 100 << 20))

    out_padded = pl.pallas_call(
        mlp_kernel,
        out_shape=jax.ShapeDtypeStruct((B, out_p), jnp.float32),
        grid_spec=pltpu.PrefetchScalarGridSpec(
            num_scalar_prefetch=0,
            grid=grid,
            in_specs=[
                # x: streamed per batch tile (double-buffered by the pipeline);
                # the last (possibly ragged) block is masked by Pallas.
                pl.BlockSpec((tb, in_p), lambda i: (i, 0)),
                # Weights/biases: constant index_map -> fetched once, VMEM-resident.
                pl.BlockSpec((in_p, hid_p), lambda i: (0, 0)),
                pl.BlockSpec((1, hid_p), lambda i: (0, 0)),
                pl.BlockSpec((hid_p, out_p), lambda i: (0, 0)),
                pl.BlockSpec((1, out_p), lambda i: (0, 0)),
            ],
            out_specs=pl.BlockSpec((tb, out_p), lambda i: (i, 0)),
        ),
        compiler_params=pltpu.CompilerParams(
            dimension_semantics=("parallel",),   # batch axis -> megacore sharding
            vmem_limit_bytes=vmem_limit,
        ),
    )(x2d, w1p, b1p, w2p, b2p)

    # Drop the fake (padded) classes; batch is already exact (masked stores).
    return out_padded[:, :dim_out]


def init_params(key, dim_in, dim_hidden, dim_out):
    """Deterministic init mirroring torch nn.Linear (uniform +/- 1/sqrt(fan_in)).
    Weights stored as (in_features, out_features)."""
    k1, k2, k3, k4 = jax.random.split(key, 4)
    bound1 = 1.0 / (dim_in ** 0.5)
    bound2 = 1.0 / (dim_hidden ** 0.5)
    w1 = jax.random.uniform(k1, (dim_in, dim_hidden), jnp.float32, -bound1, bound1)
    b1 = jax.random.uniform(k2, (1, dim_hidden), jnp.float32, -bound1, bound1)
    w2 = jax.random.uniform(k3, (dim_hidden, dim_out), jnp.float32, -bound2, bound2)
    b2 = jax.random.uniform(k4, (1, dim_out), jnp.float32, -bound2, bound2)
    return w1, b1, w2, b2


if __name__ == "__main__":
    key = jax.random.PRNGKey(0)
    kx, kp = jax.random.split(key)

    # Small shapes implied by the forward: NCHW image flattened to C*H*W features.
    B, C, H, W = 2, 4, 16, 16
    dim_in = C * H * W          # 1024
    dim_hidden = 32
    dim_out = 10

    x = jax.random.normal(kx, (B, C, H, W), jnp.float32)
    w1, b1, w2, b2 = init_params(kp, dim_in, dim_hidden, dim_out)

    # Pure-JAX reference (dropout in eval mode == identity).
    x2d = x.reshape(B, dim_in)
    ref = jax.nn.softmax(jnp.maximum(x2d @ w1 + b1, 0.0) @ w2 + b2, axis=1)

    # f32 path (default): bit-close to the torch reference.
    out = mlp_forward(x, w1, b1, w2, b2)
    out = jax.block_until_ready(out)
    assert out.shape == (B, dim_out)
    assert jnp.allclose(jnp.sum(out, axis=1), 1.0, atol=1e-3)
    assert jnp.allclose(out, ref, atol=2e-3)

    # bf16-streaming path (halves x + weight HBM bytes): looser tolerance.
    out_bf16 = mlp_forward(x, w1, b1, w2, b2,
                           use_bf16_activations=True, use_bf16_weights=True)
    out_bf16 = jax.block_until_ready(out_bf16)
    assert out_bf16.shape == (B, dim_out)
    assert jnp.allclose(jnp.sum(out_bf16, axis=1), 1.0, atol=1e-2)
    assert jnp.allclose(out_bf16, ref, atol=3e-2)

    print("KERNEL_OK")
</pallas_src>

<mosaic_0001>
module attributes {stable_mosaic.version = 11 : i64} {
  func.func @mlp_kernel(%arg0: i32, %arg1: memref<8x1024xf32, #tpu.memory_space<vmem>>, %arg2: memref<1024x128xf32, #tpu.memory_space<vmem>>, %arg3: memref<1x128xf32, #tpu.memory_space<vmem>>, %arg4: memref<128x128xf32, #tpu.memory_space<vmem>>, %arg5: memref<1x128xf32, #tpu.memory_space<vmem>>, %arg6: memref<8x128xf32, #tpu.memory_space<vmem>>) attributes {dimension_semantics = [#tpu.dimension_semantics<parallel>], iteration_bounds = array<i64: 1>, scalar_prefetch = 0 : i64, scratch_operands = 0 : i64, tpu.core_type = #tpu.core_type<tc>, window_params = [{transform_indices = @transform_0, window_bounds = array<i64: 8, 1024>}, {pipeline_mode = #tpu.pipeline_mode<synchronous>, transform_indices = @transform_1, window_bounds = array<i64: 1024, 128>}, {pipeline_mode = #tpu.pipeline_mode<synchronous>, transform_indices = @transform_2, window_bounds = array<i64: 1, 128>}, {pipeline_mode = #tpu.pipeline_mode<synchronous>, transform_indices = @transform_3, window_bounds = array<i64: 128, 128>}, {pipeline_mode = #tpu.pipeline_mode<synchronous>, transform_indices = @transform_4, window_bounds = array<i64: 1, 128>}, {transform_indices = @transform_5, window_bounds = array<i64: 8, 128>}]} {
    %c0 = arith.constant 0 : index
    %c0_0 = arith.constant 0 : index
    %0 = vector.load %arg1[%c0, %c0_0] : memref<8x1024xf32, #tpu.memory_space<vmem>>, vector<8x1024xf32>
    %c0_1 = arith.constant 0 : index
    %c0_2 = arith.constant 0 : index
    %1 = vector.load %arg2[%c0_1, %c0_2] : memref<1024x128xf32, #tpu.memory_space<vmem>>, vector<1024x128xf32>
    %cst = arith.constant dense<0.000000e+00> : vector<8x128xf32>
    %2 = tpu.matmul %0, %1, %cst {dimension_numbers = #tpu.dot_dimension_numbers<[1], [0], [0], [1], [0, 0, 1, 1], [], []>} : vector<8x1024xf32>, vector<1024x128xf32>, vector<8x128xf32> -> vector<8x128xf32>
    %c0_3 = arith.constant 0 : index
    %c0_4 = arith.constant 0 : index
    %3 = vector.load %arg3[%c0_3, %c0_4] : memref<1x128xf32, #tpu.memory_space<vmem>>, vector<1x128xf32>
    %4 = vector.broadcast %3 : vector<1x128xf32> to vector<8x128xf32>
    %5 = arith.addf %2, %4 : vector<8x128xf32>
    %cst_5 = arith.constant 0.000000e+00 : f32
    %6 = vector.broadcast %cst_5 : f32 to vector<8x128xf32>
    %7 = arith.maximumf %5, %6 : vector<8x128xf32>
    %c0_6 = arith.constant 0 : index
    %c0_7 = arith.constant 0 : index
    %8 = vector.load %arg4[%c0_6, %c0_7] : memref<128x128xf32, #tpu.memory_space<vmem>>, vector<128x128xf32>
    %cst_8 = arith.constant dense<0.000000e+00> : vector<8x128xf32>
    %9 = tpu.matmul %7, %8, %cst_8 {dimension_numbers = #tpu.dot_dimension_numbers<[1], [0], [0], [1], [0, 0, 1, 1], [], []>} : vector<8x128xf32>, vector<128x128xf32>, vector<8x128xf32> -> vector<8x128xf32>
    %c0_9 = arith.constant 0 : index
    %c0_10 = arith.constant 0 : index
    %10 = vector.load %arg5[%c0_9, %c0_10] : memref<1x128xf32, #tpu.memory_space<vmem>>, vector<1x128xf32>
    %11 = vector.broadcast %10 : vector<1x128xf32> to vector<8x128xf32>
    %12 = arith.addf %9, %11 : vector<8x128xf32>
    %cst_11 = arith.constant dense<0xFF800000> : vector<8xf32>
    %13 = vector.multi_reduction <maximumf>, %12, %cst_11 [1] : vector<8x128xf32> to vector<8xf32>
    %14 = vector.shape_cast %13 : vector<8xf32> to vector<8x1xf32>
    %15 = vector.broadcast %14 : vector<8x1xf32> to vector<8x128xf32>
    %16 = arith.subf %12, %15 : vector<8x128xf32>
    %17 = math.exp %16 : vector<8x128xf32>
    %cst_12 = arith.constant dense<0.000000e+00> : vector<8xf32>
    %18 = vector.multi_reduction <add>, %17, %cst_12 [1] : vector<8x128xf32> to vector<8xf32>
    %19 = vector.shape_cast %18 : vector<8xf32> to vector<8x1xf32>
    %20 = vector.broadcast %19 : vector<8x1xf32> to vector<8x128xf32>
    %21 = arith.divf %17, %20 : vector<8x128xf32>
    %c0_13 = arith.constant 0 : index
    %c0_14 = arith.constant 0 : index
    %22 = vector.load %arg6[%c0_13, %c0_14] : memref<8x128xf32, #tpu.memory_space<vmem>>, vector<8x128xf32>
    tpu.vector_store %arg6[%c0_13, %c0_14], %21 {strides = array<i32>} : memref<8x128xf32, #tpu.memory_space<vmem>>, vector<8x128xf32>,
    return
  }
  func.func @transform_0(%arg0: i32) -> (i32, i32) {
    %c0_i32 = arith.constant 0 : i32
    %c0_i32_0 = arith.constant 0 : i32
    return %arg0, %c0_i32 : i32, i32
  }
  func.func @transform_1(%arg0: i32) -> (i32, i32) {
    %c0_i32 = arith.constant 0 : i32
    %c0_i32_0 = arith.constant 0 : i32
    %c0_i32_1 = arith.constant 0 : i32
    return %c0_i32, %c0_i32_0 : i32, i32
  }
  func.func @transform_2(%arg0: i32) -> (i32, i32) {
    %c0_i32 = arith.constant 0 : i32
    %c0_i32_0 = arith.constant 0 : i32
    %c0_i32_1 = arith.constant 0 : i32
    return %c0_i32, %c0_i32_0 : i32, i32
  }
  func.func @transform_3(%arg0: i32) -> (i32, i32) {
    %c0_i32 = arith.constant 0 : i32
    %c0_i32_0 = arith.constant 0 : i32
    %c0_i32_1 = arith.constant 0 : i32
    return %c0_i32, %c0_i32_0 : i32, i32
  }
  func.func @transform_4(%arg0: i32) -> (i32, i32) {
    %c0_i32 = arith.constant 0 : i32
    %c0_i32_0 = arith.constant 0 : i32
    %c0_i32_1 = arith.constant 0 : i32
    return %c0_i32, %c0_i32_0 : i32, i32
  }
  func.func @transform_5(%arg0: i32) -> (i32, i32) {
    %c0_i32 = arith.constant 0 : i32
    %c0_i32_0 = arith.constant 0 : i32
    return %arg0, %c0_i32 : i32, i32
  }
}

</mosaic_0001>

<llo_original>
// kernel: tpu_custom_call.1
$region0: #{tpu_custom_call.1}
  #allocation0 [shape = 'u32[]', space=smem, size = 0x4, offset = 0x4, fixed_abs, tag = 'smem constant byte address 0x4 - core index']
  #allocation1 [shape = 'u32[72,128]{1,0:T(1,128)}', space=vmem, size = 0x9000, scoped, tag = 'internal scratch']
  %s0 = inlined_call_operand.hbm [shape: f32[2,1024], index: 0, kind: input, shape index: {}]
  %s1 = inlined_call_operand.hbm [shape: f32[1024,128], index: 1, kind: input, shape index: {}]
  %s2 = inlined_call_operand.vmem [shape: f32[1,128], index: 2, kind: input, shape index: {}]
  %s3 = inlined_call_operand.hbm [shape: f32[128,128], index: 3, kind: input, shape index: {}]
  %s4 = inlined_call_operand.vmem [shape: f32[1,128], index: 4, kind: input, shape index: {}]
  %s5 = inlined_call_operand.hbm [shape: f32[2,128], index: 5, kind: output, shape index: {}]
  %s6 = sld [smem:[#allocation0]]
  $region42: #{tpu_custom_call.1} parent=0
    _
  %s8 = ssub.s32 1, %s6
  %s9 = scalar_select 0, %s8, %s6
  $region1: #{tpu_custom_call.1} parent=0
    #allocation2 [shape = 'u8[32768]{0}', space=vmem, size = 0x8000, scoped, tag = 'input window, operand 0, single buffered']
    #allocation3 [shape = 's32[1]{0}', space=sflag, size = 0x4, scoped, tag = 'scoped memory for tpu_custom_call.1']
    #allocation4 [shape = 's32[1]{0}', space=sflag, size = 0x4, scoped, tag = 'scoped memory for tpu_custom_call.1']
    #allocation5 [shape = 'u8[524288]{0}', space=vmem, size = 0x80000, scoped, tag = 'input window, operand 1, single buffered']
    #allocation6 [shape = 's32[1]{0}', space=sflag, size = 0x4, scoped, tag = 'scoped memory for tpu_custom_call.1']
    #allocation7 [shape = 'u8[65536]{0}', space=vmem, size = 0x10000, scoped, tag = 'input window, operand 3, single buffered']
    #allocation8 [shape = 'u8[4096]{0}', space=vmem, size = 0x1000, scoped, tag = 'output window, operand 0, single buffered']
    %10 = vsyncpa [#allocation3], 0
    %11 = vsyncpa [#allocation6], 0
    %12 = vsyncpa [#allocation4], 0
    // Predicated region
    $region2: #{tpu_custom_call.1} parent=1 // pred_check
      _
    $region3: #{tpu_custom_call.1} parent=1 // pred_check_branch
      %14 = sbr.rel (0) target = $region5
    $region4: #{tpu_custom_call.1} parent=1 // pred_region
      %16 = vsyncadd [#allocation3], 768
      %s17 = sshll.u32 %s0, 4
      %s18 = int_to_ptr.hbm [resolvable:$true] %s17
      %s19 = sshll.u32 [#allocation2], 4
      %s20 = int_to_ptr.vmem [resolvable:$true] %s19
      %25 = dma.hbm_to_vmem [thread:$0]  %s18, 256, %s20, [#allocation3], 256, 256, 16
    $region5: #{tpu_custom_call.1} parent=1 // pred_fallthru
      _
    // Predicated region
    $region6: #{tpu_custom_call.1} parent=1 // pred_check
      _
    $region7: #{tpu_custom_call.1} parent=1 // pred_check_branch
      %27 = sbr.rel (0) target = $region9
    $region8: #{tpu_custom_call.1} parent=1 // pred_region
      %29 = vsyncadd [#allocation6], 0
      %s30 = sshll.u32 %s1, 4
      %s31 = int_to_ptr.hbm [resolvable:$true] %s30
      %s32 = sshll.u32 [#allocation5], 4
      %s33 = int_to_ptr.vmem [resolvable:$true] %s32
      %38 = dma.hbm_to_vmem [thread:$0]  %s31, 16384, %s33, [#allocation6], 128, 128, 8
    $region9: #{tpu_custom_call.1} parent=1 // pred_fallthru
      _
    // Predicated region
    $region10: #{tpu_custom_call.1} parent=1 // pred_check
      _
    $region11: #{tpu_custom_call.1} parent=1 // pred_check_branch
      %40 = sbr.rel (0) target = $region13
    $region12: #{tpu_custom_call.1} parent=1 // pred_region
      _
    $region13: #{tpu_custom_call.1} parent=1 // pred_fallthru
      _
    // Predicated region
    $region14: #{tpu_custom_call.1} parent=1 // pred_check
      _
    $region15: #{tpu_custom_call.1} parent=1 // pred_check_branch
      %42 = sbr.rel (0) target = $region17
    $region16: #{tpu_custom_call.1} parent=1 // pred_region
      %44 = vsyncadd [#allocation6], 0
      %s45 = sshll.u32 %s3, 4
      %s46 = int_to_ptr.hbm [resolvable:$true] %s45
      %s47 = sshll.u32 [#allocation7], 4
      %s48 = int_to_ptr.vmem [resolvable:$true] %s47
      %53 = dma.hbm_to_vmem [thread:$0]  %s46, 2048, %s48, [#allocation6], 128, 128, 8
    $region17: #{tpu_custom_call.1} parent=1 // pred_fallthru
      _
    // Predicated region
    $region18: #{tpu_custom_call.1} parent=1 // pred_check
      _
    $region19: #{tpu_custom_call.1} parent=1 // pred_check_branch
      %55 = sbr.rel (0) target = $region21
    $region20: #{tpu_custom_call.1} parent=1 // pred_region
      _
    $region21: #{tpu_custom_call.1} parent=1 // pred_fallthru
      _
    // Predicated region
    $region22: #{tpu_custom_call.1} parent=1 // pred_check
      _
    $region23: #{tpu_custom_call.1} parent=1 // pred_check_branch
      %57 = sbr.rel (0) target = $region25
    $region24: #{tpu_custom_call.1} parent=1 // pred_region
      %59 = dma.done [#allocation3], 1024
    $region25: #{tpu_custom_call.1} parent=1 // pred_fallthru
      _
    // Predicated region
    $region26: #{tpu_custom_call.1} parent=1 // pred_check
      _
    $region27: #{tpu_custom_call.1} parent=1 // pred_check_branch
      %61 = sbr.rel (0) target = $region29
    $region28: #{tpu_custom_call.1} parent=1 // pred_region
      %63 = dma.done [#allocation6], 16384
    $region29: #{tpu_custom_call.1} parent=1 // pred_fallthru
      _
    // Predicated region
    $region30: #{tpu_custom_call.1} parent=1 // pred_check
      _
    $region31: #{tpu_custom_call.1} parent=1 // pred_check_branch
      %65 = sbr.rel (0) target = $region33
    $region32: #{tpu_custom_call.1} parent=1 // pred_region
      %67 = dma.done [#allocation6], 2048
    $region33: #{tpu_custom_call.1} parent=1 // pred_fallthru
      _
    %v68 = vld [vmem:[#allocation2] sm:$0xff]
    %v69 = vld [vmem:[#allocation2 + $0x8] sm:$0xff]
    %v70 = vld [vmem:[#allocation2 + $0x10] sm:$0xff]
    %v71 = vld [vmem:[#allocation2 + $0x18] sm:$0xff]
    %v72 = vld [vmem:[#allocation2 + $0x20] sm:$0xff]
    %v73 = vld [vmem:[#allocation2 + $0x28] sm:$0xff]
    %v74 = vld [vmem:[#allocation2 + $0x30] sm:$0xff]
    %v75 = vld [vmem:[#allocation2 + $0x38] sm:$0xff]
    %v76 = vld [vmem:[#allocation5] sm:$0xff]
    %v77 = vld [vmem:[#allocation5 + $0x8] sm:$0xff]
    %v78 = vld [vmem:[#allocation5 + $0x10] sm:$0xff]
    %v79 = vld [vmem:[#allocation5 + $0x18] sm:$0xff]
    %v80 = vld [vmem:[#allocation5 + $0x20] sm:$0xff]
    %v81 = vld [vmem:[#allocation5 + $0x28] sm:$0xff]
    %v82 = vld [vmem:[#allocation5 + $0x30] sm:$0xff]
    %v83 = vld [vmem:[#allocation5 + $0x38] sm:$0xff]
    %v84 = vld [vmem:[#allocation5 + $0x40] sm:$0xff]
    %v85 = vld [vmem:[#allocation5 + $0x48] sm:$0xff]
    %v86 = vld [vmem:[#allocation5 + $0x50] sm:$0xff]
    %v87 = vld [vmem:[#allocation5 + $0x58] sm:$0xff]
    %v88 = vld [vmem:[#allocation5 + $0x60] sm:$0xff]
    %v89 = vld [vmem:[#allocation5 + $0x68] sm:$0xff]
    %v90 = vld [vmem:[#allocation5 + $0x70] sm:$0xff]
    %v91 = vld [vmem:[#allocation5 + $0x78] sm:$0xff]
    %v92 = vld [vmem:[#allocation5 + $0x80] sm:$0xff]
    %v93 = vld [vmem:[#allocation5 + $0x88] sm:$0xff]
    %v94 = vld [vmem:[#allocation5 + $0x90] sm:$0xff]
    %v95 = vld [vmem:[#allocation5 + $0x98] sm:$0xff]
    %v96 = vld [vmem:[#allocation5 + $0xa0] sm:$0xff]
    %v97 = vld [vmem:[#allocation5 + $0xa8] sm:$0xff]
    %v98 = vld [vmem:[#allocation5 + $0xb0] sm:$0xff]
    %v99 = vld [vmem:[#allocation5 + $0xb8] sm:$0xff]
    %v100 = vld [vmem:[#allocation5 + $0xc0] sm:$0xff]
    %v101 = vld [vmem:[#allocation5 + $0xc8] sm:$0xff]
    %v102 = vld [vmem:[#allocation5 + $0xd0] sm:$0xff]
    %v103 = vld [vmem:[#allocation5 + $0xd8] sm:$0xff]
    %v104 = vld [vmem:[#allocation5 + $0xe0] sm:$0xff]
    %v105 = vld [vmem:[#allocation5 + $0xe8] sm:$0xff]
    %v106 = vld [vmem:[#allocation5 + $0xf0] sm:$0xff]
    %v107 = vld [vmem:[#allocation5 + $0xf8] sm:$0xff]
    %v108 = vld [vmem:[#allocation5 + $0x100] sm:$0xff]
    %v109 = vld [vmem:[#allocation5 + $0x108] sm:$0xff]
    %v110 = vld [vmem:[#allocation5 + $0x110] sm:$0xff]
    %v111 = vld [vmem:[#allocation5 + $0x118] sm:$0xff]
    %v112 = vld [vmem:[#allocation5 + $0x120] sm:$0xff]
    %v113 = vld [vmem:[#allocation5 + $0x128] sm:$0xff]
    %v114 = vld [vmem:[#allocation5 + $0x130] sm:$0xff]
    %v115 = vld [vmem:[#allocation5 + $0x138] sm:$0xff]
    %v116 = vld [vmem:[#allocation5 + $0x140] sm:$0xff]
    %v117 = vld [vmem:[#allocation5 + $0x148] sm:$0xff]
    %v118 = vld [vmem:[#allocation5 + $0x150] sm:$0xff]
    %v119 = vld [vmem:[#allocation5 + $0x158] sm:$0xff]
    %v120 = vld [vmem:[#allocation5 + $0x160] sm:$0xff]
    %v121 = vld [vmem:[#allocation5 + $0x168] sm:$0xff]
    %v122 = vld [vmem:[#allocation5 + $0x170] sm:$0xff]
    %v123 = vld [vmem:[#allocation5 + $0x178] sm:$0xff]
    %v124 = vld [vmem:[#allocation5 + $0x180] sm:$0xff]
    %v125 = vld [vmem:[#allocation5 + $0x188] sm:$0xff]
    %v126 = vld [vmem:[#allocation5 + $0x190] sm:$0xff]
    %v127 = vld [vmem:[#allocation5 + $0x198] sm:$0xff]
    %v128 = vld [vmem:[#allocation5 + $0x1a0] sm:$0xff]
    %v129 = vld [vmem:[#allocation5 + $0x1a8] sm:$0xff]
    %v130 = vld [vmem:[#allocation5 + $0x1b0] sm:$0xff]
    %v131 = vld [vmem:[#allocation5 + $0x1b8] sm:$0xff]
    %v132 = vld [vmem:[#allocation5 + $0x1c0] sm:$0xff]
    %v133 = vld [vmem:[#allocation5 + $0x1c8] sm:$0xff]
    %v134 = vld [vmem:[#allocation5 + $0x1d0] sm:$0xff]
    %v135 = vld [vmem:[#allocation5 + $0x1d8] sm:$0xff]
    %v136 = vld [vmem:[#allocation5 + $0x1e0] sm:$0xff]
    %v137 = vld [vmem:[#allocation5 + $0x1e8] sm:$0xff]
    %v138 = vld [vmem:[#allocation5 + $0x1f0] sm:$0xff]
    %v139 = vld [vmem:[#allocation5 + $0x1f8] sm:$0xff]
    %v140 = vld [vmem:[#allocation5 + $0x200] sm:$0xff]
    %v141 = vld [vmem:[#allocation5 + $0x208] sm:$0xff]
    %v142 = vld [vmem:[#allocation5 + $0x210] sm:$0xff]
    %v143 = vld [vmem:[#allocation5 + $0x218] sm:$0xff]
    %v144 = vld [vmem:[#allocation5 + $0x220] sm:$0xff]
    %v145 = vld [vmem:[#allocation5 + $0x228] sm:$0xff]
    %v146 = vld [vmem:[#allocation5 + $0x230] sm:$0xff]
    %v147 = vld [vmem:[#allocation5 + $0x238] sm:$0xff]
    %v148 = vld [vmem:[#allocation5 + $0x240] sm:$0xff]
    %v149 = vld [vmem:[#allocation5 + $0x248] sm:$0xff]
    %v150 = vld [vmem:[#allocation5 + $0x250] sm:$0xff]
    %v151 = vld [vmem:[#allocation5 + $0x258] sm:$0xff]
    %v152 = vld [vmem:[#allocation5 + $0x260] sm:$0xff]
    %v153 = vld [vmem:[#allocation5 + $0x268] sm:$0xff]
    %v154 = vld [vmem:[#allocation5 + $0x270] sm:$0xff]
    %v155 = vld [vmem:[#allocation5 + $0x278] sm:$0xff]
    %v156 = vld [vmem:[#allocation5 + $0x280] sm:$0xff]
    %v157 = vld [vmem:[#allocation5 + $0x288] sm:$0xff]
    %v158 = vld [vmem:[#allocation5 + $0x290] sm:$0xff]
    %v159 = vld [vmem:[#allocation5 + $0x298] sm:$0xff]
    %v160 = vld [vmem:[#allocation5 + $0x2a0] sm:$0xff]
    %v161 = vld [vmem:[#allocation5 + $0x2a8] sm:$0xff]
    %v162 = vld [vmem:[#allocation5 + $0x2b0] sm:$0xff]
    %v163 = vld [vmem:[#allocation5 + $0x2b8] sm:$0xff]
    %v164 = vld [vmem:[#allocation5 + $0x2c0] sm:$0xff]
    %v165 = vld [vmem:[#allocation5 + $0x2c8] sm:$0xff]
    %v166 = vld [vmem:[#allocation5 + $0x2d0] sm:$0xff]
    %v167 = vld [vmem:[#allocation5 + $0x2d8] sm:$0xff]
    %v168 = vld [vmem:[#allocation5 + $0x2e0] sm:$0xff]
    %v169 = vld [vmem:[#allocation5 + $0x2e8] sm:$0xff]
    %v170 = vld [vmem:[#allocation5 + $0x2f0] sm:$0xff]
    %v171 = vld [vmem:[#allocation5 + $0x2f8] sm:$0xff]
    %v172 = vld [vmem:[#allocation5 + $0x300] sm:$0xff]
    %v173 = vld [vmem:[#allocation5 + $0x308] sm:$0xff]
    %v174 = vld [vmem:[#allocation5 + $0x310] sm:$0xff]
    %v175 = vld [vmem:[#allocation5 + $0x318] sm:$0xff]
    %v176 = vld [vmem:[#allocation5 + $0x320] sm:$0xff]
    %v177 = vld [vmem:[#allocation5 + $0x328] sm:$0xff]
    %v178 = vld [vmem:[#allocation5 + $0x330] sm:$0xff]
    %v179 = vld [vmem:[#allocation5 + $0x338] sm:$0xff]
    %v180 = vld [vmem:[#allocation5 + $0x340] sm:$0xff]
    %v181 = vld [vmem:[#allocation5 + $0x348] sm:$0xff]
    %v182 = vld [vmem:[#allocation5 + $0x350] sm:$0xff]
    %v183 = vld [vmem:[#allocation5 + $0x358] sm:$0xff]
    %v184 = vld [vmem:[#allocation5 + $0x360] sm:$0xff]
    %v185 = vld [vmem:[#allocation5 + $0x368] sm:$0xff]
    %v186 = vld [vmem:[#allocation5 + $0x370] sm:$0xff]
    %v187 = vld [vmem:[#allocation5 + $0x378] sm:$0xff]
    %v188 = vld [vmem:[#allocation5 + $0x380] sm:$0xff]
    %v189 = vld [vmem:[#allocation5 + $0x388] sm:$0xff]
    %v190 = vld [vmem:[#allocation5 + $0x390] sm:$0xff]
    %v191 = vld [vmem:[#allocation5 + $0x398] sm:$0xff]
    %v192 = vld [vmem:[#allocation5 + $0x3a0] sm:$0xff]
    %v193 = vld [vmem:[#allocation5 + $0x3a8] sm:$0xff]
    %v194 = vld [vmem:[#allocation5 + $0x3b0] sm:$0xff]
    %v195 = vld [vmem:[#allocation5 + $0x3b8] sm:$0xff]
    %v196 = vld [vmem:[#allocation5 + $0x3c0] sm:$0xff]
    %v197 = vld [vmem:[#allocation5 + $0x3c8] sm:$0xff]
    %v198 = vld [vmem:[#allocation5 + $0x3d0] sm:$0xff]
    %v199 = vld [vmem:[#allocation5 + $0x3d8] sm:$0xff]
    %v200 = vld [vmem:[#allocation5 + $0x3e0] sm:$0xff]
    %v201 = vld [vmem:[#allocation5 + $0x3e8] sm:$0xff]
    %v202 = vld [vmem:[#allocation5 + $0x3f0] sm:$0xff]
    %v203 = vld [vmem:[#allocation5 + $0x3f8] sm:$0xff]
    %v204 = vld [vmem:[%s2] sm:$0x1]
    %v206 = vperm.slane %v204, 0
    %216 = vst [vmem:[#allocation1] ss:$4 sm:$0xff] %v68
    %s217 = scalar_lea.vmem [#allocation1], 1
    %218 = vst [vmem:[%s217] ss:$4 sm:$0xff] %v70
    %s219 = scalar_lea.vmem [#allocation1], 2
    %220 = vst [vmem:[%s219] ss:$4 sm:$0xff] %v72
    %s221 = scalar_lea.vmem [#allocation1], 3
    %222 = vst [vmem:[%s221] ss:$4 sm:$0xff] %v74
    %s223 = scalar_lea.vmem [#allocation1], 32
    %224 = vst [vmem:[%s223] ss:$4 sm:$0xff] %v69
    %s225 = scalar_lea.vmem [#allocation1], 33
    %226 = vst [vmem:[%s225] ss:$4 sm:$0xff] %v71
    %s227 = scalar_lea.vmem [#allocation1], 34
    %228 = vst [vmem:[%s227] ss:$4 sm:$0xff] %v73
    %s229 = scalar_lea.vmem [#allocation1], 35
    %230 = vst [vmem:[%s229] ss:$4 sm:$0xff] %v75
    %v231 = vld.sshfl [vmem:[#allocation1] sm:$0xff pattern:$0x73625140]
    %v232 = vld.sshfl [vmem:[#allocation1 + $0x8] sm:$0xff pattern:$0x73625140]
    %v233 = vld.sshfl [vmem:[#allocation1 + $0x10] sm:$0xff pattern:$0x73625140]
    %v234 = vld.sshfl [vmem:[#allocation1 + $0x18] sm:$0xff pattern:$0x73625140]
    %v235 = vld.sshfl [vmem:[#allocation1 + $0x20] sm:$0xff pattern:$0x73625140]
    %v236 = vld.sshfl [vmem:[#allocation1 + $0x28] sm:$0xff pattern:$0x73625140]
    %v237 = vld.sshfl [vmem:[#allocation1 + $0x30] sm:$0xff pattern:$0x73625140]
    %v238 = vld.sshfl [vmem:[#allocation1 + $0x38] sm:$0xff pattern:$0x73625140]
    %247 = vmatpush.msra.mxu0 %v91
    %248 = vmatpush.msra.mxu0 %v90
    %249 = vmatpush.msra.mxu0 %v89
    %250 = vmatpush.msra.mxu0 %v88
    %251 = vmatpush.msra.mxu0 %v87
    %252 = vmatpush.msra.mxu0 %v86
    %253 = vmatpush.msra.mxu0 %v85
    %254 = vmatpush.msra.mxu0 %v84
    %255 = vmatpush.msra.mxu0 %v83
    %256 = vmatpush.msra.mxu0 %v82
    %257 = vmatpush.msra.mxu0 %v81
    %258 = vmatpush.msra.mxu0 %v80
    %259 = vmatpush.msra.mxu0 %v79
    %260 = vmatpush.msra.mxu0 %v78
    %261 = vmatpush.msra.mxu0 %v77
    %262 = vmatpush.msra.mxu0 %v76
    %263 = vmatmul.f32.gmra.mxu0 %v231
    %v264 = vpop.f32.mrf.mxu0
    %v265 = vadd.f32 %v206, %v264
    %266 = vdwg.mxu0
    %267 = vmatpush.msra.mxu0 %v107
    %268 = vmatpush.msra.mxu0 %v106
    %269 = vmatpush.msra.mxu0 %v105
    %270 = vmatpush.msra.mxu0 %v104
    %271 = vmatpush.msra.mxu0 %v103
    %272 = vmatpush.msra.mxu0 %v102
    %273 = vmatpush.msra.mxu0 %v101
    %274 = vmatpush.msra.mxu0 %v100
    %275 = vmatpush.msra.mxu0 %v99
    %276 = vmatpush.msra.mxu0 %v98
    %277 = vmatpush.msra.mxu0 %v97
    %278 = vmatpush.msra.mxu0 %v96
    %279 = vmatpush.msra.mxu0 %v95
    %280 = vmatpush.msra.mxu0 %v94
    %281 = vmatpush.msra.mxu0 %v93
    %282 = vmatpush.msra.mxu0 %v92
    %283 = vmatmul.f32.gmra.mxu0 %v232
    %v284 = vpop.f32.mrf.mxu0
    %v285 = vadd.f32 %v265, %v284
    %286 = vdwg.mxu0
    %287 = vmatpush.msra.mxu0 %v123
    %288 = vmatpush.msra.mxu0 %v122
    %289 = vmatpush.msra.mxu0 %v121
    %290 = vmatpush.msra.mxu0 %v120
    %291 = vmatpush.msra.mxu0 %v119
    %292 = vmatpush.msra.mxu0 %v118
    %293 = vmatpush.msra.mxu0 %v117
    %294 = vmatpush.msra.mxu0 %v116
    %295 = vmatpush.msra.mxu0 %v115
    %296 = vmatpush.msra.mxu0 %v114
    %297 = vmatpush.msra.mxu0 %v113
    %298 = vmatpush.msra.mxu0 %v112
    %299 = vmatpush.msra.mxu0 %v111
    %300 = vmatpush.msra.mxu0 %v110
    %301 = vmatpush.msra.mxu0 %v109
    %302 = vmatpush.msra.mxu0 %v108
    %303 = vmatmul.f32.gmra.mxu0 %v233
    %v304 = vpop.f32.mrf.mxu0
    %v305 = vadd.f32 %v285, %v304
    %306 = vdwg.mxu0
    %307 = vmatpush.msra.mxu0 %v139
    %308 = vmatpush.msra.mxu0 %v138
    %309 = vmatpush.msra.mxu0 %v137
    %310 = vmatpush.msra.mxu0 %v136
    %311 = vmatpush.msra.mxu0 %v135
    %312 = vmatpush.msra.mxu0 %v134
    %313 = vmatpush.msra.mxu0 %v133
    %314 = vmatpush.msra.mxu0 %v132
    %315 = vmatpush.msra.mxu0 %v131
    %316 = vmatpush.msra.mxu0 %v130
    %317 = vmatpush.msra.mxu0 %v129
    %318 = vmatpush.msra.mxu0 %v128
    %319 = vmatpush.msra.mxu0 %v127
    %320 = vmatpush.msra.mxu0 %v126
    %321 = vmatpush.msra.mxu0 %v125
    %322 = vmatpush.msra.mxu0 %v124
    %323 = vmatmul.f32.gmra.mxu0 %v234
    %v324 = vpop.f32.mrf.mxu0
    %v325 = vadd.f32 %v305, %v324
    %326 = vdwg.mxu0
    %327 = vmatpush.msra.mxu0 %v155
    %328 = vmatpush.msra.mxu0 %v154
    %329 = vmatpush.msra.mxu0 %v153
    %330 = vmatpush.msra.mxu0 %v152
    %331 = vmatpush.msra.mxu0 %v151
    %332 = vmatpush.msra.mxu0 %v150
    %333 = vmatpush.msra.mxu0 %v149
    %334 = vmatpush.msra.mxu0 %v148
    %335 = vmatpush.msra.mxu0 %v147
    %336 = vmatpush.msra.mxu0 %v146
    %337 = vmatpush.msra.mxu0 %v145
    %338 = vmatpush.msra.mxu0 %v144
    %339 = vmatpush.msra.mxu0 %v143
    %340 = vmatpush.msra.mxu0 %v142
    %341 = vmatpush.msra.mxu0 %v141
    %342 = vmatpush.msra.mxu0 %v140
    %343 = vmatmul.f32.gmra.mxu0 %v235
    %v344 = vpop.f32.mrf.mxu0
    %v345 = vadd.f32 %v325, %v344
    %346 = vdwg.mxu0
    %347 = vmatpush.msra.mxu0 %v171
    %348 = vmatpush.msra.mxu0 %v170
    %349 = vmatpush.msra.mxu0 %v169
    %350 = vmatpush.msra.mxu0 %v168
    %351 = vmatpush.msra.mxu0 %v167
    %352 = vmatpush.msra.mxu0 %v166
    %353 = vmatpush.msra.mxu0 %v165
    %354 = vmatpush.msra.mxu0 %v164
    %355 = vmatpush.msra.mxu0 %v163
    %356 = vmatpush.msra.mxu0 %v162
    %357 = vmatpush.msra.mxu0 %v161
    %358 = vmatpush.msra.mxu0 %v160
    %359 = vmatpush.msra.mxu0 %v159
    %360 = vmatpush.msra.mxu0 %v158
    %361 = vmatpush.msra.mxu0 %v157
    %362 = vmatpush.msra.mxu0 %v156
    %363 = vmatmul.f32.gmra.mxu0 %v236
    %v364 = vpop.f32.mrf.mxu0
    %v365 = vadd.f32 %v345, %v364
    %366 = vdwg.mxu0
    %367 = vmatpush.msra.mxu0 %v187
    %368 = vmatpush.msra.mxu0 %v186
    %369 = vmatpush.msra.mxu0 %v185
    %370 = vmatpush.msra.mxu0 %v184
    %371 = vmatpush.msra.mxu0 %v183
    %372 = vmatpush.msra.mxu0 %v182
    %373 = vmatpush.msra.mxu0 %v181
    %374 = vmatpush.msra.mxu0 %v180
    %375 = vmatpush.msra.mxu0 %v179
    %376 = vmatpush.msra.mxu0 %v178
    %377 = vmatpush.msra.mxu0 %v177
    %378 = vmatpush.msra.mxu0 %v176
    %379 = vmatpush.msra.mxu0 %v175
    %380 = vmatpush.msra.mxu0 %v174
    %381 = vmatpush.msra.mxu0 %v173
    %382 = vmatpush.msra.mxu0 %v172
    %383 = vmatmul.f32.gmra.mxu0 %v237
    %v384 = vpop.f32.mrf.mxu0
    %v385 = vadd.f32 %v365, %v384
    %386 = vdwg.mxu0
    %387 = vmatpush.msra.mxu0 %v203
    %388 = vmatpush.msra.mxu0 %v202
    %389 = vmatpush.msra.mxu0 %v201
    %390 = vmatpush.msra.mxu0 %v200
    %391 = vmatpush.msra.mxu0 %v199
    %392 = vmatpush.msra.mxu0 %v198
    %393 = vmatpush.msra.mxu0 %v197
    %394 = vmatpush.msra.mxu0 %v196
    %395 = vmatpush.msra.mxu0 %v195
    %396 = vmatpush.msra.mxu0 %v194
    %397 = vmatpush.msra.mxu0 %v193
    %398 = vmatpush.msra.mxu0 %v192
    %399 = vmatpush.msra.mxu0 %v191
    %400 = vmatpush.msra.mxu0 %v190
    %401 = vmatpush.msra.mxu0 %v189
    %402 = vmatpush.msra.mxu0 %v188
    %403 = vmatmul.f32.gmra.mxu0 %v238
    %v404 = vpop.f32.mrf.mxu0
    %v405 = vadd.f32 %v385, %v404
    %406 = vdwg.mxu0
    %v407 = vmax.f32 %v405, 0.0
    %v408 = vld [vmem:[#allocation7] sm:$0xff]
    %v409 = vld [vmem:[#allocation7 + $0x8] sm:$0xff]
    %v410 = vld [vmem:[#allocation7 + $0x10] sm:$0xff]
    %v411 = vld [vmem:[#allocation7 + $0x18] sm:$0xff]
    %v412 = vld [vmem:[#allocation7 + $0x20] sm:$0xff]
    %v413 = vld [vmem:[#allocation7 + $0x28] sm:$0xff]
    %v414 = vld [vmem:[#allocation7 + $0x30] sm:$0xff]
    %v415 = vld [vmem:[#allocation7 + $0x38] sm:$0xff]
    %v416 = vld [vmem:[#allocation7 + $0x40] sm:$0xff]
    %v417 = vld [vmem:[#allocation7 + $0x48] sm:$0xff]
    %v418 = vld [vmem:[#allocation7 + $0x50] sm:$0xff]
    %v419 = vld [vmem:[#allocation7 + $0x58] sm:$0xff]
    %v420 = vld [vmem:[#allocation7 + $0x60] sm:$0xff]
    %v421 = vld [vmem:[#allocation7 + $0x68] sm:$0xff]
    %v422 = vld [vmem:[#allocation7 + $0x70] sm:$0xff]
    %v423 = vld [vmem:[#allocation7 + $0x78] sm:$0xff]
    %v424 = vld [vmem:[%s4] sm:$0x1]
    %v426 = vperm.slane %v424, 0
    %428 = vmatpush.msra.mxu0 %v423
    %429 = vmatpush.msra.mxu0 %v422
    %430 = vmatpush.msra.mxu0 %v421
    %431 = vmatpush.msra.mxu0 %v420
    %432 = vmatpush.msra.mxu0 %v419
    %433 = vmatpush.msra.mxu0 %v418
    %434 = vmatpush.msra.mxu0 %v417
    %435 = vmatpush.msra.mxu0 %v416
    %436 = vmatpush.msra.mxu0 %v415
    %437 = vmatpush.msra.mxu0 %v414
    %438 = vmatpush.msra.mxu0 %v413
    %439 = vmatpush.msra.mxu0 %v412
    %440 = vmatpush.msra.mxu0 %v411
    %441 = vmatpush.msra.mxu0 %v410
    %442 = vmatpush.msra.mxu0 %v409
    %443 = vmatpush.msra.mxu0 %v408
    %444 = vmatmul.f32.gmra.mxu0 %v407
    %v445 = vpop.f32.mrf.mxu0
    %v446 = vadd.f32 %v426, %v445
    %447 = vdwg.mxu0
    %448 = vmax.xlane.f32.xlu0 %v446
    %v449 = vpop.xlane.xlu0 %448
    %v450 = vsub.f32 %v446, %v449
    %v451 = vmul.f32 %v450, 1.442695
    %v452 = vpow.pop %v451
    %453 = vadd.xlane.f32.xlu0 %v452
    %v454 = vpop.xlane.xlu0 %453
    %v455 = vrcp.pop %v454
    %v456 = vmul.f32 %v454, %v455
    %v457 = vsub.f32 1.0, %v456
    %v458 = vmul.f32 %v455, %v457
    %v459 = vadd.f32 %v455, %v458
    %vm460 = vweird.f32 %v454
    %vm461 = vweird.f32 %v455
    %vm462 = vmor %vm460, %vm461
    %v463 = vsel %vm462, %v455, %v459
    %v464 = vand.u32 2147483647, %v454
    %vm465 = vcmp.eq.f32.partialorder %v464, 8.507059e+37
    %v466 = vand.u32 %v454, 2147483648
    %v467 = vor.u32 1.1754944e-38, %v466
    %v468 = vsel %vm465, %v467, %v463
    %v469 = vmul.f32 %v452, %v468
    %470 = vst [vmem:[#allocation8] sm:$0xff] %v469
    // Predicated region
    $region34: #{tpu_custom_call.1} parent=1 // pred_check
      _
    $region35: #{tpu_custom_call.1} parent=1 // pred_check_branch
      %472 = sbr.rel (0) target = $region37
    $region36: #{tpu_custom_call.1} parent=1 // pred_region
      %474 = vsyncadd [#allocation4], 96
      %s475 = sshll.u32 [#allocation8], 4
      %s476 = int_to_ptr.vmem [resolvable:$true] %s475
      %s477 = sshll.u32 %s5, 4
      %s478 = int_to_ptr.hbm [resolvable:$true] %s477
      %483 = dma.vmem_to_hbm [thread:$0]  %s476, 32, %s478, [#allocation4], 32, 32, 2
    $region37: #{tpu_custom_call.1} parent=1 // pred_fallthru
      _
    // Predicated region
    $region38: #{tpu_custom_call.1} parent=1 // pred_check
      _
    $region39: #{tpu_custom_call.1} parent=1 // pred_check_branch
      %485 = sbr.rel (0) target = $region41
    $region40: #{tpu_custom_call.1} parent=1 // pred_region
      %487 = dma.done [#allocation4], 128
    $region41: #{tpu_custom_call.1} parent=1 // pred_fallthru
      _
    %488 = vsyncpa [#allocation3], 1
    %489 = vsyncpa [#allocation6], 1
    %490 = vsyncpa [#allocation4], 1

</llo_original>
